<compile_context>
chip_gen: v7x
topology: tpu7x:2x2x1
jax: 0.10.0
libtpu: 0.0.40
codegen_flags: <defaults>
</compile_context>

<pallas_src>
import jax
import jax.numpy as jnp
from jax.experimental import pallas as pl
from jax.experimental.pallas import tpu as pltpu

N = 5              # QP dimension fixed by qpNet (Q, p, G, A, b are all 5-dim)
EPS = 1e-3         # Q = eps * eye(5)
NEG_CLAMP = -1.0 / EPS
_LANE = 128


def _round_up(v, m):
    return (v + m - 1) // m * m


def qpnet_kernel(nw_ref, nb_ref, x_ref, out_ref):
    """One feature-major batch tile: fused fc1 + closed-form QP.

    nw_ref : (N, N)       negated fc1 weight (-W), VMEM resident across tiles
    nb_ref : (N, 1)       negated fc1 bias (-b) as a column
    x_ref  : (N, TILE_B)  activations, batch on the 128-lane axis
    out_ref: (N, TILE_B)
    """
    x = x_ref[...]                         # one dense load of the tile
    nw = nw_ref[...]                       # (N, N): a single vreg
    # acc[j, i] = -(sum_k W[j,k] * x[k,i] + b[j]); built from the pre-negated
    # weights/bias so the final clamp needs no extra negation pass.
    acc = nb_ref[...]                      # (N, 1); broadcast folds into add 0
    for k in range(N):                     # K = 5 -> 5 unrolled rank-1 VPU MACs
        acc = acc + nw[:, k:k + 1] * x[k:k + 1, :]
    # TODO(synk): a general interior-point QP solver (and the KKT-inverse
    # Jacobian qp_fwd builds, used only by backward) has no clean Pallas
    # equivalent; the closed form below is exact for qpNet's fixed QP data.
    out_ref[...] = jnp.maximum(NEG_CLAMP, acc).astype(out_ref.dtype)


def _choose_tile(B, tile_b):
    tile_b = max(_LANE, _round_up(min(tile_b, max(B, 1)), _LANE))
    # v7x megacore: keep >= 2 grid steps over the "parallel" batch axis so both
    # TensorCores get work whenever the batch allows it.
    if B > _LANE and pl.cdiv(B, tile_b) < 2:
        tile_b = max(_LANE, _round_up(pl.cdiv(B, 2), _LANE))
    return tile_b


def qpnet_forward_fm(xT, w, b, *, tile_b=65536, out_dtype=None):
    """Feature-major Pallas path.  xT: (N, B) f32 -> (N, B)."""
    n, B = xT.shape
    assert n == N and w.shape == (N, N) and b.shape == (N,)
    out_dtype = xT.dtype if out_dtype is None else out_dtype

    tile_b = _choose_tile(B, tile_b)
    grid = (pl.cdiv(B, tile_b),)

    nw = (-w).astype(jnp.float32)                  # (N, N): negligible host work
    nb = (-b).astype(jnp.float32).reshape(N, 1)    # (N, 1)

    return pl.pallas_call(
        qpnet_kernel,
        out_shape=jax.ShapeDtypeStruct((N, B), out_dtype),
        grid=grid,
        in_specs=[
            # -W / -b: constant block index -> fetched once, VMEM resident.
            pl.BlockSpec((N, N), lambda i: (0, 0)),
            pl.BlockSpec((N, 1), lambda i: (0, 0)),
            # Activations: batch on the 128-lane axis, full feature extent (5)
            # on sublanes -> dense loads/stores, no 5/128 lane masking.
            pl.BlockSpec((N, tile_b), lambda i: (0, i)),
        ],
        out_specs=pl.BlockSpec((N, tile_b), lambda i: (0, i)),
        compiler_params=pltpu.CompilerParams(
            dimension_semantics=("parallel",)),
    )(nw, nb, xT)


def qpnet_reference(x, w, b):
    """Plain-XLA forward with identical semantics (used for small batches)."""
    l = x @ w.T + b
    return jnp.maximum(NEG_CLAMP, -l)


def qpnet_forward(x, w, b, *, tile_b=65536, use_kernel=None, out_dtype=None):
    """Row-major API matching qpNet: x (B, N) f32 -> (B, N)."""
    B, n = x.shape
    assert n == N and w.shape == (N, N) and b.shape == (N,)

    if use_kernel is None:
        # The fused XLA matmul+clamp wins below a few hundred thousand rows
        # (launch/step overhead plus the wrapper transposes); only stream
        # through Pallas at scale.
        use_kernel = B >= 262144
    if not use_kernel:
        out = qpnet_reference(x, w, b)
        return out if out_dtype is None else out.astype(out_dtype)

    # Layout plumbing only: present a feature-major (N, B) slab so the batch
    # rides the lane axis inside the kernel.  Feature-major callers should use
    # qpnet_forward_fm directly and skip both transposes.
    outT = qpnet_forward_fm(x.T, w, b, tile_b=tile_b, out_dtype=out_dtype)
    return outT.T


if __name__ == "__main__":
    key = jax.random.PRNGKey(0)
    k_w, k_b, k_x1, k_x2 = jax.random.split(key, 4)

    # Deterministic PyTorch-Linear-style init: U(-1/sqrt(n), 1/sqrt(n)).
    bound = 1.0 / (N ** 0.5)
    w = jax.random.uniform(k_w, (N, N), jnp.float32, -bound, bound)
    b = jax.random.uniform(k_b, (N,), jnp.float32, -bound, bound)

    # Small batch forced through the Pallas path (single masked lane tile).
    x_small = jax.random.normal(k_x1, (8, N), jnp.float32)
    out_small = qpnet_forward(x_small, w, b, use_kernel=True)
    jax.block_until_ready(out_small)
    assert out_small.shape == (8, N)
    assert jnp.allclose(out_small, qpnet_reference(x_small, w, b),
                        atol=1e-5, rtol=1e-5)

    # Multi-tile batch: >= 2 grid steps, resident weights, masked partial
    # final lane tile.
    x_big = jax.random.normal(k_x2, (300, N), jnp.float32)
    out_big = qpnet_forward(x_big, w, b, tile_b=128, use_kernel=True)
    jax.block_until_ready(out_big)
    assert out_big.shape == (300, N)
    assert jnp.allclose(out_big, qpnet_reference(x_big, w, b),
                        atol=1e-5, rtol=1e-5)

    # Feature-major entry point (no wrapper transposes).
    outT = qpnet_forward_fm(x_big.T, w, b, tile_b=128)
    jax.block_until_ready(outT)
    assert outT.shape == (N, 300)
    assert jnp.allclose(outT.T, qpnet_reference(x_big, w, b),
                        atol=1e-5, rtol=1e-5)

    print("KERNEL_OK")
</pallas_src>

<mosaic_0001>
module attributes {stable_mosaic.version = 11 : i64} {
  func.func @qpnet_kernel(%arg0: i32, %arg1: memref<5x5xf32, #tpu.memory_space<vmem>>, %arg2: memref<5x1xf32, #tpu.memory_space<vmem>>, %arg3: memref<5x128xf32, #tpu.memory_space<vmem>>, %arg4: memref<5x128xf32, #tpu.memory_space<vmem>>) attributes {dimension_semantics = [#tpu.dimension_semantics<parallel>], iteration_bounds = array<i64: 1>, scalar_prefetch = 0 : i64, scratch_operands = 0 : i64, tpu.core_type = #tpu.core_type<tc>, window_params = [{pipeline_mode = #tpu.pipeline_mode<synchronous>, transform_indices = @transform_0, window_bounds = array<i64: 5, 5>}, {pipeline_mode = #tpu.pipeline_mode<synchronous>, transform_indices = @transform_1, window_bounds = array<i64: 5, 1>}, {transform_indices = @transform_2, window_bounds = array<i64: 5, 128>}, {transform_indices = @transform_3, window_bounds = array<i64: 5, 128>}]} {
    %c0 = arith.constant 0 : index
    %c0_0 = arith.constant 0 : index
    %0 = vector.load %arg3[%c0, %c0_0] : memref<5x128xf32, #tpu.memory_space<vmem>>, vector<5x128xf32>
    %c0_1 = arith.constant 0 : index
    %c0_2 = arith.constant 0 : index
    %1 = vector.load %arg1[%c0_1, %c0_2] : memref<5x5xf32, #tpu.memory_space<vmem>>, vector<5x5xf32>
    %c0_3 = arith.constant 0 : index
    %c0_4 = arith.constant 0 : index
    %2 = vector.load %arg2[%c0_3, %c0_4] : memref<5x1xf32, #tpu.memory_space<vmem>>, vector<5x1xf32>
    %3 = vector.extract_strided_slice %1 {offsets = [0, 0], sizes = [5, 1], strides = [1, 1]} : vector<5x5xf32> to vector<5x1xf32>
    %4 = vector.extract_strided_slice %0 {offsets = [0, 0], sizes = [1, 128], strides = [1, 1]} : vector<5x128xf32> to vector<1x128xf32>
    %5 = vector.broadcast %3 : vector<5x1xf32> to vector<5x128xf32>
    %6 = vector.broadcast %4 : vector<1x128xf32> to vector<5x128xf32>
    %7 = arith.mulf %5, %6 : vector<5x128xf32>
    %8 = vector.broadcast %2 : vector<5x1xf32> to vector<5x128xf32>
    %9 = arith.addf %8, %7 : vector<5x128xf32>
    %10 = vector.extract_strided_slice %1 {offsets = [0, 1], sizes = [5, 1], strides = [1, 1]} : vector<5x5xf32> to vector<5x1xf32>
    %11 = vector.extract_strided_slice %0 {offsets = [1, 0], sizes = [1, 128], strides = [1, 1]} : vector<5x128xf32> to vector<1x128xf32>
    %12 = vector.broadcast %10 : vector<5x1xf32> to vector<5x128xf32>
    %13 = vector.broadcast %11 : vector<1x128xf32> to vector<5x128xf32>
    %14 = arith.mulf %12, %13 : vector<5x128xf32>
    %15 = arith.addf %9, %14 : vector<5x128xf32>
    %16 = vector.extract_strided_slice %1 {offsets = [0, 2], sizes = [5, 1], strides = [1, 1]} : vector<5x5xf32> to vector<5x1xf32>
    %17 = vector.extract_strided_slice %0 {offsets = [2, 0], sizes = [1, 128], strides = [1, 1]} : vector<5x128xf32> to vector<1x128xf32>
    %18 = vector.broadcast %16 : vector<5x1xf32> to vector<5x128xf32>
    %19 = vector.broadcast %17 : vector<1x128xf32> to vector<5x128xf32>
    %20 = arith.mulf %18, %19 : vector<5x128xf32>
    %21 = arith.addf %15, %20 : vector<5x128xf32>
    %22 = vector.extract_strided_slice %1 {offsets = [0, 3], sizes = [5, 1], strides = [1, 1]} : vector<5x5xf32> to vector<5x1xf32>
    %23 = vector.extract_strided_slice %0 {offsets = [3, 0], sizes = [1, 128], strides = [1, 1]} : vector<5x128xf32> to vector<1x128xf32>
    %24 = vector.broadcast %22 : vector<5x1xf32> to vector<5x128xf32>
    %25 = vector.broadcast %23 : vector<1x128xf32> to vector<5x128xf32>
    %26 = arith.mulf %24, %25 : vector<5x128xf32>
    %27 = arith.addf %21, %26 : vector<5x128xf32>
    %28 = vector.extract_strided_slice %1 {offsets = [0, 4], sizes = [5, 1], strides = [1, 1]} : vector<5x5xf32> to vector<5x1xf32>
    %29 = vector.extract_strided_slice %0 {offsets = [4, 0], sizes = [1, 128], strides = [1, 1]} : vector<5x128xf32> to vector<1x128xf32>
    %30 = vector.broadcast %28 : vector<5x1xf32> to vector<5x128xf32>
    %31 = vector.broadcast %29 : vector<1x128xf32> to vector<5x128xf32>
    %32 = arith.mulf %30, %31 : vector<5x128xf32>
    %33 = arith.addf %27, %32 : vector<5x128xf32>
    %cst = arith.constant -1.000000e+03 : f32
    %34 = vector.broadcast %cst : f32 to vector<5x128xf32>
    %35 = arith.maximumf %34, %33 : vector<5x128xf32>
    %c0_5 = arith.constant 0 : index
    %c0_6 = arith.constant 0 : index
    %36 = vector.load %arg4[%c0_5, %c0_6] : memref<5x128xf32, #tpu.memory_space<vmem>>, vector<5x128xf32>
    tpu.vector_store %arg4[%c0_5, %c0_6], %35 {strides = array<i32>} : memref<5x128xf32, #tpu.memory_space<vmem>>, vector<5x128xf32>,
    return
  }
  func.func @transform_0(%arg0: i32) -> (i32, i32) {
    %c0_i32 = arith.constant 0 : i32
    %c0_i32_0 = arith.constant 0 : i32
    %c0_i32_1 = arith.constant 0 : i32
    return %c0_i32, %c0_i32_0 : i32, i32
  }
  func.func @transform_1(%arg0: i32) -> (i32, i32) {
    %c0_i32 = arith.constant 0 : i32
    %c0_i32_0 = arith.constant 0 : i32
    %c0_i32_1 = arith.constant 0 : i32
    return %c0_i32, %c0_i32_0 : i32, i32
  }
  func.func @transform_2(%arg0: i32) -> (i32, i32) {
    %c0_i32 = arith.constant 0 : i32
    %c0_i32_0 = arith.constant 0 : i32
    return %c0_i32, %arg0 : i32, i32
  }
  func.func @transform_3(%arg0: i32) -> (i32, i32) {
    %c0_i32 = arith.constant 0 : i32
    %c0_i32_0 = arith.constant 0 : i32
    return %c0_i32, %arg0 : i32, i32
  }
}

</mosaic_0001>

<llo_original>
// kernel: tpu_custom_call.1
$region0: #{tpu_custom_call.1}
  #allocation0 [shape = 'u32[]', space=smem, size = 0x4, offset = 0x4, fixed_abs, tag = 'smem constant byte address 0x4 - core index']
  #allocation1 [shape = 'u32[144,128]{1,0:T(1,128)}', space=vmem, size = 0x12000, scoped, tag = 'internal scratch']
  %s0 = inlined_call_operand.vmem [shape: f32[5,5], index: 0, kind: input, shape index: {}]
  %s1 = inlined_call_operand.vmem [shape: f32[5,1], index: 1, kind: input, shape index: {}]
  %s2 = inlined_call_operand.vmem [shape: f32[5,8], index: 2, kind: input, shape index: {}]
  %s3 = inlined_call_operand.hbm [shape: f32[5,8], index: 3, kind: output, shape index: {}]
  %s4 = sld [smem:[#allocation0]]
  $region22: #{tpu_custom_call.1} parent=0
    _
  %s6 = ssub.s32 1, %s4
  %s7 = scalar_select 0, %s6, %s4
  $region1: #{tpu_custom_call.1} parent=0
    #allocation2 [shape = 'u8[4096]{0}', space=vmem, size = 0x1000, scoped, tag = 'output window, operand 0, single buffered']
    #allocation3 [shape = 's32[1]{0}', space=sflag, size = 0x4, scoped, tag = 'scoped memory for tpu_custom_call.1']
    %8 = vsyncpa [#allocation3], 0
    // Predicated region
    $region2: #{tpu_custom_call.1} parent=1 // pred_check
      _
    $region3: #{tpu_custom_call.1} parent=1 // pred_check_branch
      %10 = sbr.rel (0) target = $region5
    $region4: #{tpu_custom_call.1} parent=1 // pred_region
      _
    $region5: #{tpu_custom_call.1} parent=1 // pred_fallthru
      _
    // Predicated region
    $region6: #{tpu_custom_call.1} parent=1 // pred_check
      _
    $region7: #{tpu_custom_call.1} parent=1 // pred_check_branch
      %12 = sbr.rel (0) target = $region9
    $region8: #{tpu_custom_call.1} parent=1 // pred_region
      _
    $region9: #{tpu_custom_call.1} parent=1 // pred_fallthru
      _
    // Predicated region
    $region10: #{tpu_custom_call.1} parent=1 // pred_check
      _
    $region11: #{tpu_custom_call.1} parent=1 // pred_check_branch
      %14 = sbr.rel (0) target = $region13
    $region12: #{tpu_custom_call.1} parent=1 // pred_region
      _
    $region13: #{tpu_custom_call.1} parent=1 // pred_fallthru
      _
    %v15 = vld [vmem:[%s2] sm:$0x1f]
    %v16 = vld [vmem:[%s0] sm:$0x1f]
    %v17 = vld [vmem:[%s1] sm:$0x1f]
    %19 = vset.pattern.permute.xlu0 0
    %20 = vperm.xlu0 %19, %v16
    %v21 = vpop.permute.xlu0 %20
    %v23 = vlaneseq
    %v24 = vshrl.u32 %v23, 7
    %v25 = vsub.s32 0, %v24
    %v26 = vrot.slane %v15, %v25
    %v27 = vmul.f32 %v21, %v26
    %29 = vset.pattern.permute.xlu0 0
    %30 = vperm.xlu0 %29, %v17
    %v31 = vpop.permute.xlu0 %30
    %v33 = vadd.f32 %v31, %v27
    %34 = vset.pattern.permute.xlu0 1
    %35 = vperm.xlu0 %34, %v16
    %v36 = vpop.permute.xlu0 %35
    %v38 = vlaneseq
    %v39 = vshrl.u32 %v38, 7
    %v40 = vsub.s32 1, %v39
    %v41 = vrot.slane %v15, %v40
    %v42 = vmul.f32 %v36, %v41
    %v43 = vadd.f32 %v33, %v42
    %44 = vset.pattern.permute.xlu0 2
    %45 = vperm.xlu0 %44, %v16
    %v46 = vpop.permute.xlu0 %45
    %v48 = vlaneseq
    %v49 = vshrl.u32 %v48, 7
    %v50 = vsub.s32 2, %v49
    %v51 = vrot.slane %v15, %v50
    %v52 = vmul.f32 %v46, %v51
    %v53 = vadd.f32 %v43, %v52
    %54 = vset.pattern.permute.xlu0 3
    %55 = vperm.xlu0 %54, %v16
    %v56 = vpop.permute.xlu0 %55
    %v58 = vlaneseq
    %v59 = vshrl.u32 %v58, 7
    %v60 = vsub.s32 3, %v59
    %v61 = vrot.slane %v15, %v60
    %v62 = vmul.f32 %v56, %v61
    %v63 = vadd.f32 %v53, %v62
    %64 = vset.pattern.permute.xlu0 4
    %65 = vperm.xlu0 %64, %v16
    %v66 = vpop.permute.xlu0 %65
    %v68 = vlaneseq
    %v69 = vshrl.u32 %v68, 7
    %v70 = vsub.s32 4, %v69
    %v71 = vrot.slane %v15, %v70
    %v72 = vmul.f32 %v66, %v71
    %v73 = vadd.f32 %v63, %v72
    %v74 = vmax.f32 %v73, -1000.0
    %75 = vst [vmem:[#allocation2] sm:$0x1f] %v74
    // Predicated region
    $region14: #{tpu_custom_call.1} parent=1 // pred_check
      _
    $region15: #{tpu_custom_call.1} parent=1 // pred_check_branch
      %77 = sbr.rel (0) target = $region17
    $region16: #{tpu_custom_call.1} parent=1 // pred_region
      %s79 = ssub.s32 128, 128
      %80 = vsyncadd [#allocation3], %s79
      %s82 = sshll.u32 [#allocation2], 4
      %s83 = int_to_ptr.vmem [resolvable:$true] %s82
      %85 = dma.vmem_to_hbm [thread:$0]  %s83, 128, %s3, [#allocation3]
    $region17: #{tpu_custom_call.1} parent=1 // pred_fallthru
      _
    // Predicated region
    $region18: #{tpu_custom_call.1} parent=1 // pred_check
      _
    $region19: #{tpu_custom_call.1} parent=1 // pred_check_branch
      %87 = sbr.rel (0) target = $region21
    $region20: #{tpu_custom_call.1} parent=1 // pred_region
      %88 = dma.done [#allocation3], 128
    $region21: #{tpu_custom_call.1} parent=1 // pred_fallthru
      _
    %89 = vsyncpa [#allocation3], 1

</llo_original>
